<compile_context>
chip_gen: v7x
topology: tpu7x:2x2x1
jax: 0.10.0
libtpu: 0.0.40
codegen_flags: <defaults>
</compile_context>

<pallas_src>
import math
import jax
import jax.numpy as jnp
from jax.experimental import pallas as pl
from jax.experimental.pallas import tpu as pltpu


def _round_up(x, m):
    return ((x + m - 1) // m) * m


def _matmul_bias_kernel(w_ref, x_ref, b_ref, o_ref, acc_ref):
    # w_ref  : (tm, tk)  weight tile
    # x_ref  : (tk, tn)  batch-folded input tile (D, B*F)
    # b_ref  : (1,  tn)  bias tile (bias[f] replicated across the folded batch)
    # o_ref  : (tm, tn)  output tile
    # acc_ref: (tm, tn)  f32 accumulator, resident across the K grid axis
    k = pl.program_id(2)

    @pl.when(k == 0)
    def _():
        acc_ref[...] = jnp.zeros_like(acc_ref)

    acc_ref[...] += jnp.dot(w_ref[...], x_ref[...],
                            preferred_element_type=jnp.float32)

    @pl.when(k == pl.num_programs(2) - 1)
    def _():
        o_ref[...] = (acc_ref[...] + b_ref[...]).astype(o_ref.dtype)


def weight_fusion(x, weight, bias, *, tm=256, tn=256, tk=512):
    """x: (B, D, F), weight: (N, D), bias: (N,) with F == N (PyTorch broadcast)."""
    B, D, F = x.shape
    N = weight.shape[0]
    assert weight.shape == (N, D)
    assert bias.shape == (N,) and F == N, "PyTorch broadcasting requires F == input_feature"

    # ---- fold batch into the lane axis: one lane-dense matmul ----
    L = B * F
    x2 = jnp.transpose(x, (1, 0, 2)).reshape(D, L)     # x2[d, b*F + f] = x[b, d, f]
    bias_fused = jnp.tile(bias, B)                     # bias_fused[b*F + f] = bias[f]

    # ---- tile sizes: shrink for small problems, keep (8,128) alignment ----
    tm = min(tm, _round_up(N, 8))      # sublane dim of weight/out tiles
    tn = min(tn, _round_up(L, 128))    # lane dim of input/out tiles
    tk = min(tk, _round_up(D, 128))    # lane dim of weight / sublane dim of input

    Mp = _round_up(N, tm)
    Lp = _round_up(L, tn)
    Kp = _round_up(D, tk)

    # Zero-pad to tile multiples (zero K padding keeps the reduction exact).
    w_p = jnp.pad(weight, ((0, Mp - N), (0, Kp - D)))
    x_p = jnp.pad(x2, ((0, Kp - D), (0, Lp - L)))
    b_p = jnp.pad(bias_fused, (0, Lp - L)).reshape(1, Lp)

    grid = (Mp // tm, Lp // tn, Kp // tk)

    flops = 2 * Mp * Kp * Lp
    bytes_accessed = 4 * (Mp * Kp + Kp * Lp + Lp + Mp * Lp)

    out2 = pl.pallas_call(
        _matmul_bias_kernel,
        out_shape=jax.ShapeDtypeStruct((Mp, Lp), x.dtype),
        grid_spec=pltpu.PrefetchScalarGridSpec(
            num_scalar_prefetch=0,
            grid=grid,
            in_specs=[
                pl.BlockSpec((tm, tk), lambda i, j, k: (i, k)),   # weight tile
                pl.BlockSpec((tk, tn), lambda i, j, k: (k, j)),   # input tile
                pl.BlockSpec((1, tn), lambda i, j, k: (0, j)),    # bias tile
            ],
            out_specs=pl.BlockSpec((tm, tn), lambda i, j, k: (i, j)),
            scratch_shapes=[pltpu.VMEM((tm, tn), jnp.float32)],
        ),
        compiler_params=pltpu.CompilerParams(
            dimension_semantics=("parallel", "parallel", "arbitrary"),
        ),
        cost_estimate=pl.CostEstimate(
            flops=flops, transcendentals=0, bytes_accessed=bytes_accessed),
    )(w_p, x_p, b_p)

    # Unfold: (Mp, Lp) -> (N, B, F) -> (B, N, F)
    out = out2[:N, :L].reshape(N, B, F).transpose(1, 0, 2)
    return out


if __name__ == "__main__":
    # Small, deterministic setup consistent with the module.
    input_feature = 32              # N == D == F == input_feature
    B = 2

    key = jax.random.PRNGKey(0)
    k_w, k_b, k_x = jax.random.split(key, 3)

    stdv = 1.0 / math.sqrt(input_feature)
    weight = jax.random.uniform(k_w, (input_feature, input_feature),
                                dtype=jnp.float32, minval=-stdv, maxval=stdv)
    bias = jax.random.uniform(k_b, (input_feature,),
                              dtype=jnp.float32, minval=-stdv, maxval=stdv)
    x = jax.random.normal(k_x, (B, input_feature, input_feature), dtype=jnp.float32)

    fused = jax.jit(weight_fusion)
    out = fused(x, weight, bias)
    out = jax.block_until_ready(out)

    # Correctness check against a pure-JAX reference of the PyTorch semantics.
    ref = jnp.einsum('nd,bdf->bnf', weight, x) + bias  # bias broadcasts on last axis
    assert out.shape == (B, input_feature, input_feature)
    assert jnp.allclose(out, ref, atol=1e-5, rtol=1e-5)

    print("KERNEL_OK")
</pallas_src>

<mosaic_0001>
module attributes {stable_mosaic.version = 11 : i64} {
  func.func @_matmul_bias_kernel(%arg0: i32, %arg1: i32, %arg2: i32, %arg3: memref<32x128xf32, #tpu.memory_space<vmem>>, %arg4: memref<128x128xf32, #tpu.memory_space<vmem>>, %arg5: memref<1x128xf32, #tpu.memory_space<vmem>>, %arg6: memref<32x128xf32, #tpu.memory_space<vmem>>, %arg7: memref<32x128xf32, #tpu.memory_space<vmem>>) attributes {dimension_semantics = [#tpu.dimension_semantics<parallel>, #tpu.dimension_semantics<parallel>, #tpu.dimension_semantics<arbitrary>], iteration_bounds = array<i64: 1, 1, 1>, scalar_prefetch = 0 : i64, scratch_operands = 1 : i64, tpu.core_type = #tpu.core_type<tc>, window_params = [{transform_indices = @transform_0, window_bounds = array<i64: 32, 128>}, {transform_indices = @transform_1, window_bounds = array<i64: 128, 128>}, {transform_indices = @transform_2, window_bounds = array<i64: 1, 128>}, {transform_indices = @transform_3, window_bounds = array<i64: 32, 128>}]} {
    %c0_i32 = arith.constant 0 : i32
    %0 = arith.cmpi eq, %arg2, %c0_i32 : i32
    %1 = arith.extui %0 : i1 to i32
    %c0_i32_0 = arith.constant 0 : i32
    %2 = arith.cmpi ne, %1, %c0_i32_0 : i32
    scf.if %2 {
      %cst_10 = arith.constant 0.000000e+00 : f32
      %12 = vector.broadcast %cst_10 : f32 to vector<32x128xf32>
      %c0_11 = arith.constant 0 : index
      %c0_12 = arith.constant 0 : index
      %13 = vector.load %arg7[%c0_11, %c0_12] : memref<32x128xf32, #tpu.memory_space<vmem>>, vector<32x128xf32>
      tpu.vector_store %arg7[%c0_11, %c0_12], %12 {strides = array<i32>} : memref<32x128xf32, #tpu.memory_space<vmem>>, vector<32x128xf32>,
    } else {
    }
    %c0 = arith.constant 0 : index
    %c0_1 = arith.constant 0 : index
    %3 = vector.load %arg7[%c0, %c0_1] : memref<32x128xf32, #tpu.memory_space<vmem>>, vector<32x128xf32>
    %c0_2 = arith.constant 0 : index
    %c0_3 = arith.constant 0 : index
    %4 = vector.load %arg3[%c0_2, %c0_3] : memref<32x128xf32, #tpu.memory_space<vmem>>, vector<32x128xf32>
    %c0_4 = arith.constant 0 : index
    %c0_5 = arith.constant 0 : index
    %5 = vector.load %arg4[%c0_4, %c0_5] : memref<128x128xf32, #tpu.memory_space<vmem>>, vector<128x128xf32>
    %cst = arith.constant dense<0.000000e+00> : vector<32x128xf32>
    %6 = tpu.matmul %4, %5, %cst {dimension_numbers = #tpu.dot_dimension_numbers<[1], [0], [0], [1], [0, 0, 1, 1], [], []>} : vector<32x128xf32>, vector<128x128xf32>, vector<32x128xf32> -> vector<32x128xf32>
    %7 = arith.addf %3, %6 : vector<32x128xf32>
    %c0_6 = arith.constant 0 : index
    %c0_7 = arith.constant 0 : index
    %8 = vector.load %arg7[%c0_6, %c0_7] : memref<32x128xf32, #tpu.memory_space<vmem>>, vector<32x128xf32>
    tpu.vector_store %arg7[%c0_6, %c0_7], %7 {strides = array<i32>} : memref<32x128xf32, #tpu.memory_space<vmem>>, vector<32x128xf32>,
    %c0_i32_8 = arith.constant 0 : i32
    %9 = arith.cmpi eq, %arg2, %c0_i32_8 : i32
    %10 = arith.extui %9 : i1 to i32
    %c0_i32_9 = arith.constant 0 : i32
    %11 = arith.cmpi ne, %10, %c0_i32_9 : i32
    scf.if %11 {
      %c0_10 = arith.constant 0 : index
      %c0_11 = arith.constant 0 : index
      %12 = vector.load %arg7[%c0_10, %c0_11] : memref<32x128xf32, #tpu.memory_space<vmem>>, vector<32x128xf32>
      %c0_12 = arith.constant 0 : index
      %c0_13 = arith.constant 0 : index
      %13 = vector.load %arg5[%c0_12, %c0_13] : memref<1x128xf32, #tpu.memory_space<vmem>>, vector<1x128xf32>
      %14 = vector.broadcast %13 : vector<1x128xf32> to vector<32x128xf32>
      %15 = arith.addf %12, %14 : vector<32x128xf32>
      %c0_14 = arith.constant 0 : index
      %c0_15 = arith.constant 0 : index
      %16 = vector.load %arg6[%c0_14, %c0_15] : memref<32x128xf32, #tpu.memory_space<vmem>>, vector<32x128xf32>
      tpu.vector_store %arg6[%c0_14, %c0_15], %15 {strides = array<i32>} : memref<32x128xf32, #tpu.memory_space<vmem>>, vector<32x128xf32>,
    } else {
    }
    return
  }
  func.func @transform_0(%arg0: i32, %arg1: i32, %arg2: i32) -> (i32, i32) {
    %c0_i32 = arith.constant 0 : i32
    return %arg0, %arg2 : i32, i32
  }
  func.func @transform_1(%arg0: i32, %arg1: i32, %arg2: i32) -> (i32, i32) {
    %c0_i32 = arith.constant 0 : i32
    return %arg2, %arg1 : i32, i32
  }
  func.func @transform_2(%arg0: i32, %arg1: i32, %arg2: i32) -> (i32, i32) {
    %c0_i32 = arith.constant 0 : i32
    %c0_i32_0 = arith.constant 0 : i32
    return %c0_i32, %arg1 : i32, i32
  }
  func.func @transform_3(%arg0: i32, %arg1: i32, %arg2: i32) -> (i32, i32) {
    %c0_i32 = arith.constant 0 : i32
    return %arg0, %arg1 : i32, i32
  }
}

</mosaic_0001>

<llo_original>
// kernel: tile.8
$region0: #{tile.8}
  #allocation0 [shape = 's32[1]{0}', space=sflag, size = 0x4, scoped, tag = 'scoped memory for tile.8']
  %s0 = inlined_call_operand.vmem [shape: f32[32], index: 0, kind: input, shape index: {}]
  %s1 = inlined_call_operand.vmem [shape: f32[2,32], index: 1, kind: output, shape index: {}]
  // Predicated region
  $region2: #{tile.8} parent=0 // pred_check
    _
  $region3: #{tile.8} parent=0 // pred_check_branch
    %3 = sbr.rel (0) target = $region5
  $region4: #{tile.8} parent=0 // pred_region
    _
  $region5: #{tile.8} parent=0 // pred_fallthru
    _
  %v4 = vld [vmem:[%s0] ss:$0 sm:$0xff]
  %5 = vst [vmem:[%s1] sm:$0x3] %v4

// kernel: tile.9
$region0: #{tile.9}
  %s0 = inlined_call_operand.vmem [shape: f32[2,32], index: 0, kind: input, shape index: {}]
  %s1 = inlined_call_operand.vmem [shape: f32[64], index: 1, kind: output, shape index: {}]
  $region1: #{tile.9} parent=0
    #allocation0 [shape = 'u8[4096]{0}', space=vmem, size = 0x1000, scoped, tag = 'scoped mem for output reshape']
    #allocation1 [shape = 'u8[4096]{0}', space=vmem, size = 0x1000, scoped, tag = 'scoped mem for input reshape']
    %s3 = sshllo.u32 0, 2
    %v4 = vld [vmem:[%s0] sm:%s3]
    %5 = vst [vmem:[#allocation1] sm:%s3] %v4
    %v6 = vld [vmem:[#allocation1] sm:$0x1]
    %vm7 = vcmask 261120
    %8 = vst.msk [vmem:[#allocation0] sm:$0x1] %vm7, %v6
    %s9 = scalar_lea.vmem [#allocation1], 1
    %v10 = vld [vmem:[%s9] sm:$0x1]
    %11 = vrot.lane.b32.xlu0 %v10, 32
    %v12 = vpop.permute.xlu0 %11
    %vm13 = vcmask 523520
    %14 = vst.msk [vmem:[#allocation0] sm:$0x1] %vm13, %v12
    %s16 = sshllo.u32 0, 1
    %v18 = vld [vmem:[#allocation0] sm:%s16]
    %s19 = sshllo.u32 0, 1
    %20 = vst [vmem:[%s1] sm:%s19] %v18

</llo_original>
